<compile_context>
chip_gen: v6e
topology: v6e:2x2x1
jax: 0.10.0
libtpu: 0.0.40
codegen_flags: <defaults>
</compile_context>

<pallas_src>
from functools import partial

import jax
import jax.numpy as jnp
from jax.experimental import pallas as pl
from jax.experimental.pallas import tpu as pltpu

EPS = 1e-5      # nn.BatchNorm2d default
LANE = 128      # TPU lane width


def _conv_relu_stats_kernel(w_ref, p_ref, y_ref, sum_ref, ssq_ref):
    """Per M tile: (Cp, Kp) @ (Kp, tile_m) + ReLU; store tile; accumulate channel stats."""
    @pl.when(pl.program_id(0) == 0)
    def _init():
        sum_ref[...] = jnp.zeros_like(sum_ref)
        ssq_ref[...] = jnp.zeros_like(ssq_ref)

    # Conv + bias as a single MXU matmul (bias folded into the weight's extra column).
    acc = jnp.dot(w_ref[...], p_ref[...], preferred_element_type=jnp.float32)
    acc = jnp.maximum(acc, 0.0)                            # ReLU
    y_ref[...] = acc                                       # lane-dense store (tile_m lanes)
    # Global BN accumulators (cross-lane reduce -> XLU slot, cheap).
    sum_ref[...] += jnp.sum(acc, axis=1, keepdims=True)
    ssq_ref[...] += jnp.sum(acc * acc, axis=1, keepdims=True)


def _bn_apply_kernel(y_ref, s_ref, t_ref, o_ref):
    """y * scale + shift per M tile (in-place via input_output_aliases)."""
    o_ref[...] = y_ref[...] * s_ref[...] + t_ref[...]


@partial(jax.jit, static_argnames=("tile_m",))
def conv_block_forward(x_nchw, w_oihw, bias, gamma, beta, *, tile_m=512):
    """x_nchw: (N, Cin, H, W). Returns (N, Cout, Ho, Wo), matching PyTorch ConvBlock."""
    f32 = jnp.float32
    N, Cin, H, W = x_nchw.shape
    Cout, _, KH, KW = w_oihw.shape
    Ho, Wo = H - KH + 1, W - KW + 1
    M = N * Ho * Wo                              # flattened output positions
    K = KH * KW * Cin                            # conv contraction length
    Kp = ((K + 1 + 7) // 8) * 8                  # +1 bias row, rounded to sublane
    Cp = ((Cout + 7) // 8) * 8                   # channels on sublanes, pad to 8
    Mp = ((M + tile_m - 1) // tile_m) * tile_m   # lane axis padded to the tile size
    n_tiles = Mp // tile_m

    # --- im2col in the wrapper, built directly in (K, M) layout (layout plumbing).
    # K ordered (cin, kh, kw) so weights are a plain reshape; M ordered (n, oh, ow).
    xt = jnp.transpose(x_nchw, (1, 0, 2, 3)).astype(f32)            # (Cin, N, H, W)
    taps = [xt[:, :, dy:dy + Ho, dx:dx + Wo].reshape(Cin, M)
            for dy in range(KH) for dx in range(KW)]
    pt = jnp.stack(taps, axis=1).reshape(K, M)                      # (K, M)
    pt = jnp.pad(pt, ((0, 0), (0, Mp - M)))                         # zero M-padding
    ones_row = jnp.concatenate(                                     # bias row: 1 on
        [jnp.ones((1, M), f32), jnp.zeros((1, Mp - M), f32)], 1)    # valid cols only
    pt = jnp.concatenate([pt, ones_row, jnp.zeros((Kp - K - 1, Mp), f32)], axis=0)

    # weights (Cout, Cin*KH*KW) -> append bias column -> pad to (Cp, Kp).
    w2 = w_oihw.reshape(Cout, K).astype(f32)
    w2 = jnp.concatenate(
        [w2, bias.reshape(Cout, 1).astype(f32), jnp.zeros((Cout, Kp - K - 1), f32)],
        axis=1)
    w2 = jnp.pad(w2, ((0, Cp - Cout), (0, 0)))

    # --- pass 1: conv + ReLU + global sum / sumsq accumulation ---
    y2d, csum, cssq = pl.pallas_call(
        _conv_relu_stats_kernel,
        out_shape=(jax.ShapeDtypeStruct((Cp, Mp), f32),
                   jax.ShapeDtypeStruct((Cp, 1), f32),
                   jax.ShapeDtypeStruct((Cp, 1), f32)),
        grid=(n_tiles,),
        in_specs=[pl.BlockSpec((Cp, Kp), lambda i: (0, 0)),         # resident weights
                  pl.BlockSpec((Kp, tile_m), lambda i: (0, i))],
        out_specs=(pl.BlockSpec((Cp, tile_m), lambda i: (0, i)),
                   pl.BlockSpec((Cp, 1), lambda i: (0, 0)),         # grid-invariant
                   pl.BlockSpec((Cp, 1), lambda i: (0, 0))),        # accumulators
        compiler_params=pltpu.CompilerParams(
            dimension_semantics=("arbitrary",),          # stats accumulate across tiles
            vmem_limit_bytes=32 * 1024 * 1024),
        cost_estimate=pl.CostEstimate(
            flops=2 * Mp * Kp * Cp,
            transcendentals=0,
            bytes_accessed=4 * (Mp * Kp + Kp * Cp + Mp * Cp + 2 * Cp)),
    )(w2, pt)

    # --- fold BN (training-mode, biased variance) into per-channel scale/shift ---
    mean = csum / M
    var = jnp.maximum(cssq / M - mean * mean, 0.0)       # guard f32 cancellation
    g = jnp.pad(gamma.astype(f32), (0, Cp - Cout), constant_values=1.0).reshape(Cp, 1)
    b2 = jnp.pad(beta.astype(f32), (0, Cp - Cout)).reshape(Cp, 1)
    scale = g * jax.lax.rsqrt(var + EPS)
    shift = b2 - mean * scale

    # --- pass 2: normalize in place (aliased over the activation buffer) ---
    out2d = pl.pallas_call(
        _bn_apply_kernel,
        out_shape=jax.ShapeDtypeStruct((Cp, Mp), f32),
        grid=(n_tiles,),
        in_specs=[pl.BlockSpec((Cp, tile_m), lambda i: (0, i)),
                  pl.BlockSpec((Cp, 1), lambda i: (0, 0)),
                  pl.BlockSpec((Cp, 1), lambda i: (0, 0))],
        out_specs=pl.BlockSpec((Cp, tile_m), lambda i: (0, i)),
        input_output_aliases={0: 0},
        compiler_params=pltpu.CompilerParams(
            dimension_semantics=("parallel",),
            vmem_limit_bytes=32 * 1024 * 1024),
    )(y2d, scale, shift)

    # (Cout, N*Ho*Wo) -> (N, Cout, Ho, Wo); small wrapper-side layout plumbing.
    out = out2d[:Cout, :M].reshape(Cout, N, Ho, Wo)
    return jnp.transpose(out, (1, 0, 2, 3))
    # TODO(synk): PyTorch training-mode BN also updates running_mean/var buffers
    # (a side effect that does not affect this forward output); not emitted here.


def reference_forward(x_nchw, w_oihw, bias, gamma, beta):
    """Pure-JAX reference with identical semantics, for the correctness check."""
    y = jax.lax.conv_general_dilated(
        x_nchw, w_oihw, window_strides=(1, 1), padding="VALID",
        dimension_numbers=("NCHW", "OIHW", "NCHW"))
    y = y + bias.reshape(1, -1, 1, 1)
    y = jnp.maximum(y, 0.0)
    mean = jnp.mean(y, axis=(0, 2, 3), keepdims=True)
    var = jnp.mean((y - mean) ** 2, axis=(0, 2, 3), keepdims=True)
    y = (y - mean) * jax.lax.rsqrt(var + EPS)
    return y * gamma.reshape(1, -1, 1, 1) + beta.reshape(1, -1, 1, 1)


if __name__ == "__main__":
    # Small shapes consistent with ConvBlock(in_channels=4, out_channels=8)
    N, Cin, Cout, H, W = 2, 4, 8, 16, 16

    key = jax.random.PRNGKey(0)
    kx, kw, kb = jax.random.split(key, 3)
    x = jax.random.normal(kx, (N, Cin, H, W), jnp.float32)
    w = jax.random.normal(kw, (Cout, Cin, 3, 3), jnp.float32) * 0.1
    b = jax.random.normal(kb, (Cout,), jnp.float32) * 0.1
    gamma = jnp.ones((Cout,), jnp.float32)   # BatchNorm2d default weight
    beta = jnp.zeros((Cout,), jnp.float32)   # BatchNorm2d default bias

    out = conv_block_forward(x, w, b, gamma, beta)
    out = jax.block_until_ready(out)

    ref = reference_forward(x, w, b, gamma, beta)
    assert out.shape == (N, Cout, H - 2, W - 2)
    assert jnp.allclose(out, ref, atol=1e-4, rtol=1e-4), \
        float(jnp.max(jnp.abs(out - ref)))

    print("KERNEL_OK")
</pallas_src>

<mosaic_0001>
module attributes {stable_mosaic.version = 11 : i64} {
  func.func @_conv_relu_stats_kernel(%arg0: i32, %arg1: memref<8x40xf32, #tpu.memory_space<vmem>>, %arg2: memref<40x512xf32, #tpu.memory_space<vmem>>, %arg3: memref<8x512xf32, #tpu.memory_space<vmem>>, %arg4: memref<8x1xf32, #tpu.memory_space<vmem>>, %arg5: memref<8x1xf32, #tpu.memory_space<vmem>>) attributes {dimension_semantics = [#tpu.dimension_semantics<arbitrary>], iteration_bounds = array<i64: 1>, scalar_prefetch = 0 : i64, scratch_operands = 0 : i64, tpu.core_type = #tpu.core_type<tc>, window_params = [{pipeline_mode = #tpu.pipeline_mode<synchronous>, transform_indices = @transform_0, window_bounds = array<i64: 8, 40>}, {transform_indices = @transform_1, window_bounds = array<i64: 40, 512>}, {transform_indices = @transform_2, window_bounds = array<i64: 8, 512>}, {pipeline_mode = #tpu.pipeline_mode<synchronous>, transform_indices = @transform_3, window_bounds = array<i64: 8, 1>}, {pipeline_mode = #tpu.pipeline_mode<synchronous>, transform_indices = @transform_4, window_bounds = array<i64: 8, 1>}]} {
    %c0_i32 = arith.constant 0 : i32
    %0 = arith.cmpi eq, %arg0, %c0_i32 : i32
    %1 = arith.extui %0 : i1 to i32
    %c0_i32_0 = arith.constant 0 : i32
    %2 = arith.cmpi ne, %1, %c0_i32_0 : i32
    scf.if %2 {
      %cst_17 = arith.constant 0.000000e+00 : f32
      %20 = vector.broadcast %cst_17 : f32 to vector<8x1xf32>
      %c0_18 = arith.constant 0 : index
      %c0_19 = arith.constant 0 : index
      %21 = vector.load %arg4[%c0_18, %c0_19] : memref<8x1xf32, #tpu.memory_space<vmem>>, vector<8x1xf32>
      tpu.vector_store %arg4[%c0_18, %c0_19], %20 {strides = array<i32>} : memref<8x1xf32, #tpu.memory_space<vmem>>, vector<8x1xf32>,
      %cst_20 = arith.constant 0.000000e+00 : f32
      %22 = vector.broadcast %cst_20 : f32 to vector<8x1xf32>
      %c0_21 = arith.constant 0 : index
      %c0_22 = arith.constant 0 : index
      %23 = vector.load %arg5[%c0_21, %c0_22] : memref<8x1xf32, #tpu.memory_space<vmem>>, vector<8x1xf32>
      tpu.vector_store %arg5[%c0_21, %c0_22], %22 {strides = array<i32>} : memref<8x1xf32, #tpu.memory_space<vmem>>, vector<8x1xf32>,
    } else {
    }
    %c0 = arith.constant 0 : index
    %c0_1 = arith.constant 0 : index
    %3 = vector.load %arg1[%c0, %c0_1] : memref<8x40xf32, #tpu.memory_space<vmem>>, vector<8x40xf32>
    %c0_2 = arith.constant 0 : index
    %c0_3 = arith.constant 0 : index
    %4 = vector.load %arg2[%c0_2, %c0_3] : memref<40x512xf32, #tpu.memory_space<vmem>>, vector<40x512xf32>
    %cst = arith.constant dense<0.000000e+00> : vector<8x512xf32>
    %5 = tpu.matmul %3, %4, %cst {dimension_numbers = #tpu.dot_dimension_numbers<[1], [0], [0], [1], [0, 0, 1, 1], [], []>} : vector<8x40xf32>, vector<40x512xf32>, vector<8x512xf32> -> vector<8x512xf32>
    %cst_4 = arith.constant 0.000000e+00 : f32
    %6 = vector.broadcast %cst_4 : f32 to vector<8x512xf32>
    %7 = arith.maximumf %5, %6 : vector<8x512xf32>
    %c0_5 = arith.constant 0 : index
    %c0_6 = arith.constant 0 : index
    %8 = vector.load %arg3[%c0_5, %c0_6] : memref<8x512xf32, #tpu.memory_space<vmem>>, vector<8x512xf32>
    tpu.vector_store %arg3[%c0_5, %c0_6], %7 {strides = array<i32>} : memref<8x512xf32, #tpu.memory_space<vmem>>, vector<8x512xf32>,
    %c0_7 = arith.constant 0 : index
    %c0_8 = arith.constant 0 : index
    %9 = vector.load %arg4[%c0_7, %c0_8] : memref<8x1xf32, #tpu.memory_space<vmem>>, vector<8x1xf32>
    %cst_9 = arith.constant dense<0.000000e+00> : vector<8xf32>
    %10 = vector.multi_reduction <add>, %7, %cst_9 [1] : vector<8x512xf32> to vector<8xf32>
    %11 = vector.shape_cast %10 : vector<8xf32> to vector<8x1xf32>
    %12 = arith.addf %9, %11 : vector<8x1xf32>
    %c0_10 = arith.constant 0 : index
    %c0_11 = arith.constant 0 : index
    %13 = vector.load %arg4[%c0_10, %c0_11] : memref<8x1xf32, #tpu.memory_space<vmem>>, vector<8x1xf32>
    tpu.vector_store %arg4[%c0_10, %c0_11], %12 {strides = array<i32>} : memref<8x1xf32, #tpu.memory_space<vmem>>, vector<8x1xf32>,
    %c0_12 = arith.constant 0 : index
    %c0_13 = arith.constant 0 : index
    %14 = vector.load %arg5[%c0_12, %c0_13] : memref<8x1xf32, #tpu.memory_space<vmem>>, vector<8x1xf32>
    %15 = arith.mulf %7, %7 : vector<8x512xf32>
    %cst_14 = arith.constant dense<0.000000e+00> : vector<8xf32>
    %16 = vector.multi_reduction <add>, %15, %cst_14 [1] : vector<8x512xf32> to vector<8xf32>
    %17 = vector.shape_cast %16 : vector<8xf32> to vector<8x1xf32>
    %18 = arith.addf %14, %17 : vector<8x1xf32>
    %c0_15 = arith.constant 0 : index
    %c0_16 = arith.constant 0 : index
    %19 = vector.load %arg5[%c0_15, %c0_16] : memref<8x1xf32, #tpu.memory_space<vmem>>, vector<8x1xf32>
    tpu.vector_store %arg5[%c0_15, %c0_16], %18 {strides = array<i32>} : memref<8x1xf32, #tpu.memory_space<vmem>>, vector<8x1xf32>,
    return
  }
  func.func @transform_0(%arg0: i32) -> (i32, i32) {
    %c0_i32 = arith.constant 0 : i32
    %c0_i32_0 = arith.constant 0 : i32
    %c0_i32_1 = arith.constant 0 : i32
    return %c0_i32, %c0_i32_0 : i32, i32
  }
  func.func @transform_1(%arg0: i32) -> (i32, i32) {
    %c0_i32 = arith.constant 0 : i32
    %c0_i32_0 = arith.constant 0 : i32
    return %c0_i32, %arg0 : i32, i32
  }
  func.func @transform_2(%arg0: i32) -> (i32, i32) {
    %c0_i32 = arith.constant 0 : i32
    %c0_i32_0 = arith.constant 0 : i32
    return %c0_i32, %arg0 : i32, i32
  }
  func.func @transform_3(%arg0: i32) -> (i32, i32) {
    %c0_i32 = arith.constant 0 : i32
    %c0_i32_0 = arith.constant 0 : i32
    %c0_i32_1 = arith.constant 0 : i32
    return %c0_i32, %c0_i32_0 : i32, i32
  }
  func.func @transform_4(%arg0: i32) -> (i32, i32) {
    %c0_i32 = arith.constant 0 : i32
    %c0_i32_0 = arith.constant 0 : i32
    %c0_i32_1 = arith.constant 0 : i32
    return %c0_i32, %c0_i32_0 : i32, i32
  }
}

module attributes {stable_mosaic.version = 11 : i64} {
  func.func @_bn_apply_kernel(%arg0: i32, %arg1: memref<8x512xf32, #tpu.memory_space<vmem>>, %arg2: memref<8x1xf32, #tpu.memory_space<vmem>>, %arg3: memref<8x1xf32, #tpu.memory_space<vmem>>, %arg4: memref<8x512xf32, #tpu.memory_space<vmem>>) attributes {dimension_semantics = [#tpu.dimension_semantics<parallel>], iteration_bounds = array<i64: 1>, scalar_prefetch = 0 : i64, scratch_operands = 0 : i64, tpu.core_type = #tpu.core_type<tc>, window_params = [{transform_indices = @transform_0, window_bounds = array<i64: 8, 512>}, {pipeline_mode = #tpu.pipeline_mode<synchronous>, transform_indices = @transform_1, window_bounds = array<i64: 8, 1>}, {pipeline_mode = #tpu.pipeline_mode<synchronous>, transform_indices = @transform_2, window_bounds = array<i64: 8, 1>}, {transform_indices = @transform_3, window_bounds = array<i64: 8, 512>}]} {
    %c0 = arith.constant 0 : index
    %c0_0 = arith.constant 0 : index
    %0 = vector.load %arg1[%c0, %c0_0] : memref<8x512xf32, #tpu.memory_space<vmem>>, vector<8x512xf32>
    %c0_1 = arith.constant 0 : index
    %c0_2 = arith.constant 0 : index
    %1 = vector.load %arg2[%c0_1, %c0_2] : memref<8x1xf32, #tpu.memory_space<vmem>>, vector<8x1xf32>
    %2 = vector.broadcast %1 : vector<8x1xf32> to vector<8x512xf32>
    %3 = arith.mulf %0, %2 : vector<8x512xf32>
    %c0_3 = arith.constant 0 : index
    %c0_4 = arith.constant 0 : index
    %4 = vector.load %arg3[%c0_3, %c0_4] : memref<8x1xf32, #tpu.memory_space<vmem>>, vector<8x1xf32>
    %5 = vector.broadcast %4 : vector<8x1xf32> to vector<8x512xf32>
    %6 = arith.addf %3, %5 : vector<8x512xf32>
    %c0_5 = arith.constant 0 : index
    %c0_6 = arith.constant 0 : index
    %7 = vector.load %arg4[%c0_5, %c0_6] : memref<8x512xf32, #tpu.memory_space<vmem>>, vector<8x512xf32>
    tpu.vector_store %arg4[%c0_5, %c0_6], %6 {strides = array<i32>} : memref<8x512xf32, #tpu.memory_space<vmem>>, vector<8x512xf32>,
    return
  }
  func.func @transform_0(%arg0: i32) -> (i32, i32) {
    %c0_i32 = arith.constant 0 : i32
    %c0_i32_0 = arith.constant 0 : i32
    return %c0_i32, %arg0 : i32, i32
  }
  func.func @transform_1(%arg0: i32) -> (i32, i32) {
    %c0_i32 = arith.constant 0 : i32
    %c0_i32_0 = arith.constant 0 : i32
    %c0_i32_1 = arith.constant 0 : i32
    return %c0_i32, %c0_i32_0 : i32, i32
  }
  func.func @transform_2(%arg0: i32) -> (i32, i32) {
    %c0_i32 = arith.constant 0 : i32
    %c0_i32_0 = arith.constant 0 : i32
    %c0_i32_1 = arith.constant 0 : i32
    return %c0_i32, %c0_i32_0 : i32, i32
  }
  func.func @transform_3(%arg0: i32) -> (i32, i32) {
    %c0_i32 = arith.constant 0 : i32
    %c0_i32_0 = arith.constant 0 : i32
    return %c0_i32, %arg0 : i32, i32
  }
}

</mosaic_0001>

<llo_original>
// kernel: conv_block_forward.3
$region0: #{conv_block_forward.3}
  #allocation0 [shape = 'u32[]', space=smem, size = 0x4, offset = 0x4, fixed_abs, tag = 'smem constant byte address 0x4 - core index']
  #allocation1 [shape = 'u32[144,128]{1,0:T(1,128)}', space=vmem, size = 0x12000, scoped, tag = 'internal scratch']
  %s0 = inlined_call_operand.vmem [shape: f32[8,512], index: 0, kind: input, shape index: {}, may-alias: {0,3}]
  %s1 = inlined_call_operand.vmem [shape: f32[8,1], index: 1, kind: input, shape index: {}]
  %s2 = inlined_call_operand.vmem [shape: f32[8,1], index: 2, kind: input, shape index: {}]
  %s3 = inlined_call_operand.vmem [shape: f32[8,512], index: 3, kind: output, shape index: {}, may-alias: {0,3}]
  %s4 = sld [smem:[#allocation0]]
  $region22: #{conv_block_forward.3} parent=0
    _
  %s6 = ssub.s32 1, %s4
  %s7 = scalar_select 0, %s6, %s4
  // Predicated region
  $region2: #{conv_block_forward.3} parent=0 // pred_check
    _
  $region3: #{conv_block_forward.3} parent=0 // pred_check_branch
    %9 = sbr.rel (0) target = $region5
  $region4: #{conv_block_forward.3} parent=0 // pred_region
    _
  $region5: #{conv_block_forward.3} parent=0 // pred_fallthru
    _
  // Predicated region
  $region6: #{conv_block_forward.3} parent=0 // pred_check
    _
  $region7: #{conv_block_forward.3} parent=0 // pred_check_branch
    %11 = sbr.rel (0) target = $region9
  $region8: #{conv_block_forward.3} parent=0 // pred_region
    _
  $region9: #{conv_block_forward.3} parent=0 // pred_fallthru
    _
  // Predicated region
  $region10: #{conv_block_forward.3} parent=0 // pred_check
    _
  $region11: #{conv_block_forward.3} parent=0 // pred_check_branch
    %13 = sbr.rel (0) target = $region13
  $region12: #{conv_block_forward.3} parent=0 // pred_region
    _
  $region13: #{conv_block_forward.3} parent=0 // pred_fallthru
    _
  %v14 = vld [vmem:[%s0] sm:$0xff]
  %v15 = vld [vmem:[%s0 + $0x8] sm:$0xff]
  %v16 = vld [vmem:[%s0 + $0x10] sm:$0xff]
  %v17 = vld [vmem:[%s0 + $0x18] sm:$0xff]
  %v18 = vld [vmem:[%s1] sm:$0xff]
  %20 = vset.pattern.permute.xlu0 0
  %21 = vperm.xlu0 %20, %v18
  %v22 = vpop.permute.xlu0 %21
  %v24 = vmul.f32 %v14, %v22
  %v25 = vmul.f32 %v15, %v22
  %v26 = vmul.f32 %v16, %v22
  %v27 = vmul.f32 %v17, %v22
  %v28 = vld [vmem:[%s2] sm:$0xff]
  %30 = vset.pattern.permute.xlu0 0
  %31 = vperm.xlu0 %30, %v28
  %v32 = vpop.permute.xlu0 %31
  %v34 = vadd.f32 %v24, %v32
  %v35 = vadd.f32 %v25, %v32
  %v36 = vadd.f32 %v26, %v32
  %v37 = vadd.f32 %v27, %v32
  %38 = vst [vmem:[%s3] sm:$0xff] %v34
  %39 = vst [vmem:[%s3 + $0x8] sm:$0xff] %v35
  %40 = vst [vmem:[%s3 + $0x10] sm:$0xff] %v36
  %41 = vst [vmem:[%s3 + $0x18] sm:$0xff] %v37
  // Predicated region
  $region14: #{conv_block_forward.3} parent=0 // pred_check
    _
  $region15: #{conv_block_forward.3} parent=0 // pred_check_branch
    %43 = sbr.rel (0) target = $region17
  $region16: #{conv_block_forward.3} parent=0 // pred_region
    _
  $region17: #{conv_block_forward.3} parent=0 // pred_fallthru
    _
  // Predicated region
  $region18: #{conv_block_forward.3} parent=0 // pred_check
    _
  $region19: #{conv_block_forward.3} parent=0 // pred_check_branch
    %45 = sbr.rel (0) target = $region21
  $region20: #{conv_block_forward.3} parent=0 // pred_region
    _
  $region21: #{conv_block_forward.3} parent=0 // pred_fallthru
    _

// kernel: conv_block_forward.2
$region0: #{conv_block_forward.2}
  #allocation0 [shape = 'u32[]', space=smem, size = 0x4, offset = 0x4, fixed_abs, tag = 'smem constant byte address 0x4 - core index']
  #allocation1 [shape = 'u32[144,128]{1,0:T(1,128)}', space=vmem, size = 0x12000, scoped, tag = 'internal scratch']
  %s0 = inlined_call_operand.vmem [shape: f32[8,40], index: 0, kind: input, shape index: {}]
  %s1 = inlined_call_operand.vmem [shape: f32[40,512], index: 1, kind: input, shape index: {}]
  %s2 = inlined_call_operand.vmem [shape: f32[8,512], index: 2, kind: output, shape index: {0}]
  %s3 = inlined_call_operand.vmem [shape: f32[8,1], index: 3, kind: output, shape index: {1}]
  %s4 = inlined_call_operand.vmem [shape: f32[8,1], index: 4, kind: output, shape index: {2}]
  %5 = xla_tuple %s2, %s3, %s4
  %s6 = sld [smem:[#allocation0]]
  $region38: #{conv_block_forward.2} parent=0
    _
  %s8 = ssub.s32 1, %s6
  %s9 = scalar_select 0, %s8, %s6
  // Predicated region
  $region2: #{conv_block_forward.2} parent=0 // pred_check
    _
  $region3: #{conv_block_forward.2} parent=0 // pred_check_branch
    %11 = sbr.rel (0) target = $region5
  $region4: #{conv_block_forward.2} parent=0 // pred_region
    _
  $region5: #{conv_block_forward.2} parent=0 // pred_fallthru
    _
  // Predicated region
  $region6: #{conv_block_forward.2} parent=0 // pred_check
    _
  $region7: #{conv_block_forward.2} parent=0 // pred_check_branch
    %13 = sbr.rel (0) target = $region9
  $region8: #{conv_block_forward.2} parent=0 // pred_region
    _
  $region9: #{conv_block_forward.2} parent=0 // pred_fallthru
    _
  %p14 = scmp.eq.s32.totalorder 0, 0
  // Predicated region
  $region10: #{conv_block_forward.2} parent=0 // pred_check
    %p15 = pneg %p14
  $region11: #{conv_block_forward.2} parent=0 // pred_check_branch
    %17 = sbr.rel (%p15) target = $region13
  $region12: #{conv_block_forward.2} parent=0 // pred_region
    %vm18 = vcmask 7168
    %19 = vst.msk [vmem:[%s3] sm:$0xff] %vm18, 0.0
    %20 = vst.msk [vmem:[%s4] sm:$0xff] %vm18, 0.0
  $region13: #{conv_block_forward.2} parent=0 // pred_fallthru
    _
  %v21 = vld [vmem:[%s0] sm:$0xff]
  %v22 = vld [vmem:[%s1] sm:$0xff]
  %v23 = vld [vmem:[%s1 + $0x8] sm:$0xff]
  %v24 = vld [vmem:[%s1 + $0x10] sm:$0xff]
  %v25 = vld [vmem:[%s1 + $0x18] sm:$0xff]
  %v26 = vld [vmem:[%s1 + $0x20] sm:$0xff]
  %v27 = vld [vmem:[%s1 + $0x28] sm:$0xff]
  %v28 = vld [vmem:[%s1 + $0x30] sm:$0xff]
  %v29 = vld [vmem:[%s1 + $0x38] sm:$0xff]
  %v30 = vld [vmem:[%s1 + $0x40] sm:$0xff]
  %v31 = vld [vmem:[%s1 + $0x48] sm:$0xff]
  %v32 = vld [vmem:[%s1 + $0x50] sm:$0xff]
  %v33 = vld [vmem:[%s1 + $0x58] sm:$0xff]
  %v34 = vld [vmem:[%s1 + $0x60] sm:$0xff]
  %v35 = vld [vmem:[%s1 + $0x68] sm:$0xff]
  %v36 = vld [vmem:[%s1 + $0x70] sm:$0xff]
  %v37 = vld [vmem:[%s1 + $0x78] sm:$0xff]
  %v38 = vld [vmem:[%s1 + $0x80] sm:$0xff]
  %v39 = vld [vmem:[%s1 + $0x88] sm:$0xff]
  %v40 = vld [vmem:[%s1 + $0x90] sm:$0xff]
  %v41 = vld [vmem:[%s1 + $0x98] sm:$0xff]
  %vm42 = vcmask 326656
  %v44 = vsel %vm42, %v21, 0
  %46 = vmatprep.subr.mxu0 0.0
  %47 = vmatpush1.msra.mxu0 0.0
  %48 = vmatprep.subr.mxu0 0.0
  %49 = vmatpush1.msra.mxu0 0.0
  %50 = vmatprep.subr.mxu0 0.0
  %51 = vmatpush1.msra.mxu0 0.0
  %52 = vmatprep.subr.mxu0 0.0
  %53 = vmatpush1.msra.mxu0 0.0
  %54 = vmatprep.subr.mxu0 0.0
  %55 = vmatpush1.msra.mxu0 0.0
  %56 = vmatprep.subr.mxu0 0.0
  %57 = vmatpush1.msra.mxu0 0.0
  %58 = vmatprep.subr.mxu0 0.0
  %59 = vmatpush1.msra.mxu0 0.0
  %60 = vmatprep.subr.mxu0 0.0
  %61 = vmatpush1.msra.mxu0 0.0
  %62 = vmatprep.subr.mxu0 0.0
  %63 = vmatpush1.msra.mxu0 0.0
  %64 = vmatprep.subr.mxu0 0.0
  %65 = vmatpush1.msra.mxu0 0.0
  %66 = vmatprep.subr.mxu0 0.0
  %67 = vmatpush1.msra.mxu0 0.0
  %68 = vmatprep.subr.mxu0 %v39
  %69 = vmatpush1.msra.mxu0 %v38
  %70 = vmatprep.subr.mxu0 %v35
  %71 = vmatpush1.msra.mxu0 %v34
  %72 = vmatprep.subr.mxu0 %v31
  %73 = vmatpush1.msra.mxu0 %v30
  %74 = vmatprep.subr.mxu0 %v27
  %75 = vmatpush1.msra.mxu0 %v26
  %76 = vmatprep.subr.mxu0 %v23
  %77 = vmatpush1.msra.mxu0 %v22
  %78 = vmatprep.subr.mxu0 0.0
  %79 = vmatpush2.msra.mxu0 0.0
  %80 = vmatprep.subr.mxu0 0.0
  %81 = vmatpush2.msra.mxu0 0.0
  %82 = vmatprep.subr.mxu0 0.0
  %83 = vmatpush2.msra.mxu0 0.0
  %84 = vmatprep.subr.mxu0 0.0
  %85 = vmatpush2.msra.mxu0 0.0
  %86 = vmatprep.subr.mxu0 0.0
  %87 = vmatpush2.msra.mxu0 0.0
  %88 = vmatprep.subr.mxu0 0.0
  %89 = vmatpush2.msra.mxu0 0.0
  %90 = vmatprep.subr.mxu0 0.0
  %91 = vmatpush2.msra.mxu0 0.0
  %92 = vmatprep.subr.mxu0 0.0
  %93 = vmatpush2.msra.mxu0 0.0
  %94 = vmatprep.subr.mxu0 0.0
  %95 = vmatpush2.msra.mxu0 0.0
  %96 = vmatprep.subr.mxu0 0.0
  %97 = vmatpush2.msra.mxu0 0.0
  %98 = vmatprep.subr.mxu0 0.0
  %99 = vmatpush2.msra.mxu0 0.0
  %100 = vmatprep.subr.mxu0 0.0
  %101 = vmatpush2.msra.mxu0 0.0
  %102 = vmatprep.subr.mxu0 0.0
  %103 = vmatpush2.msra.mxu0 0.0
  %104 = vmatprep.subr.mxu0 0.0
  %105 = vmatpush2.msra.mxu0 0.0
  %106 = vmatprep.subr.mxu0 0.0
  %107 = vmatpush2.msra.mxu0 0.0
  %108 = vmatprep.subr.mxu0 0.0
  %109 = vmatpush2.msra.mxu0 0.0
  %110 = vmatprep.mubr.f32.mxu0 0.0
  %111 = vmatmul.mubr.f32.gmra.mxu0 %v44
  %v112 = vpop.f32.mrf.mxu0
  %v113 = vadd.f32 0.0, %v112
  %v114 = vpop.f32.mrf.mxu0
  %v115 = vadd.f32 0.0, %v114
  %116 = vdwg.mxu0
  %117 = vmatprep.subr.mxu0 0.0
  %118 = vmatpush1.msra.mxu0 0.0
  %119 = vmatprep.subr.mxu0 0.0
  %120 = vmatpush1.msra.mxu0 0.0
  %121 = vmatprep.subr.mxu0 0.0
  %122 = vmatpush1.msra.mxu0 0.0
  %123 = vmatprep.subr.mxu0 0.0
  %124 = vmatpush1.msra.mxu0 0.0
  %125 = vmatprep.subr.mxu0 0.0
  %126 = vmatpush1.msra.mxu0 0.0
  %127 = vmatprep.subr.mxu0 0.0
  %128 = vmatpush1.msra.mxu0 0.0
  %129 = vmatprep.subr.mxu0 0.0
  %130 = vmatpush1.msra.mxu0 0.0
  %131 = vmatprep.subr.mxu0 0.0
  %132 = vmatpush1.msra.mxu0 0.0
  %133 = vmatprep.subr.mxu0 0.0
  %134 = vmatpush1.msra.mxu0 0.0
  %135 = vmatprep.subr.mxu0 0.0
  %136 = vmatpush1.msra.mxu0 0.0
  %137 = vmatprep.subr.mxu0 0.0
  %138 = vmatpush1.msra.mxu0 0.0
  %139 = vmatprep.subr.mxu0 %v41
  %140 = vmatpush1.msra.mxu0 %v40
  %141 = vmatprep.subr.mxu0 %v37
  %142 = vmatpush1.msra.mxu0 %v36
  %143 = vmatprep.subr.mxu0 %v33
  %144 = vmatpush1.msra.mxu0 %v32
  %145 = vmatprep.subr.mxu0 %v29
  %146 = vmatpush1.msra.mxu0 %v28
  %147 = vmatprep.subr.mxu0 %v25
  %148 = vmatpush1.msra.mxu0 %v24
  %149 = vmatprep.subr.mxu0 0.0
  %150 = vmatpush2.msra.mxu0 0.0
  %151 = vmatprep.subr.mxu0 0.0
  %152 = vmatpush2.msra.mxu0 0.0
  %153 = vmatprep.subr.mxu0 0.0
  %154 = vmatpush2.msra.mxu0 0.0
  %155 = vmatprep.subr.mxu0 0.0
  %156 = vmatpush2.msra.mxu0 0.0
  %157 = vmatprep.subr.mxu0 0.0
  %158 = vmatpush2.msra.mxu0 0.0
  %159 = vmatprep.subr.mxu0 0.0
  %160 = vmatpush2.msra.mxu0 0.0
  %161 = vmatprep.subr.mxu0 0.0
  %162 = vmatpush2.msra.mxu0 0.0
  %163 = vmatprep.subr.mxu0 0.0
  %164 = vmatpush2.msra.mxu0 0.0
  %165 = vmatprep.subr.mxu0 0.0
  %166 = vmatpush2.msra.mxu0 0.0
  %167 = vmatprep.subr.mxu0 0.0
  %168 = vmatpush2.msra.mxu0 0.0
  %169 = vmatprep.subr.mxu0 0.0
  %170 = vmatpush2.msra.mxu0 0.0
  %171 = vmatprep.subr.mxu0 0.0
  %172 = vmatpush2.msra.mxu0 0.0
  %173 = vmatprep.subr.mxu0 0.0
  %174 = vmatpush2.msra.mxu0 0.0
  %175 = vmatprep.subr.mxu0 0.0
  %176 = vmatpush2.msra.mxu0 0.0
  %177 = vmatprep.subr.mxu0 0.0
  %178 = vmatpush2.msra.mxu0 0.0
  %179 = vmatprep.subr.mxu0 0.0
  %180 = vmatpush2.msra.mxu0 0.0
  %181 = vmatprep.mubr.f32.mxu0 0.0
  %182 = vmatmul.mubr.f32.gmra.mxu0 %v44
  %v183 = vpop.f32.mrf.mxu0
  %v184 = vadd.f32 0.0, %v183
  %v185 = vpop.f32.mrf.mxu0
  %v186 = vadd.f32 0.0, %v185
  %187 = vdwg.mxu0
  %v188 = vmax.f32 %v113, 0.0
  %v189 = vmax.f32 %v115, 0.0
  %v190 = vmax.f32 %v184, 0.0
  %v191 = vmax.f32 %v186, 0.0
  %192 = vst [vmem:[%s2] sm:$0xff] %v188
  %193 = vst [vmem:[%s2 + $0x8] sm:$0xff] %v189
  %194 = vst [vmem:[%s2 + $0x10] sm:$0xff] %v190
  %195 = vst [vmem:[%s2 + $0x18] sm:$0xff] %v191
  %v196 = vld [vmem:[%s3] sm:$0xff]
  %v197 = vadd.f32 %v188, %v189
  %v198 = vadd.f32 %v197, %v190
  %v199 = vadd.f32 %v198, %v191
  %200 = vadd.xlane.f32.xlu0 %v199
  %v201 = vpop.xlane.xlu0 %200
  %v202 = vadd.f32 %v196, %v201
  %vm203 = vcmask 7168
  %204 = vst.msk [vmem:[%s3] sm:$0xff] %vm203, %v202
  %v205 = vld [vmem:[%s4] sm:$0xff]
  %v206 = vmul.f32 %v188, %v188
  %v207 = vmul.f32 %v189, %v189
  %v208 = vmul.f32 %v190, %v190
  %v209 = vmul.f32 %v191, %v191
  %v210 = vadd.f32 %v206, %v207
  %v211 = vadd.f32 %v210, %v208
  %v212 = vadd.f32 %v211, %v209
  %213 = vadd.xlane.f32.xlu0 %v212
  %v214 = vpop.xlane.xlu0 %213
  %v215 = vadd.f32 %v205, %v214
  %216 = vst.msk [vmem:[%s4] sm:$0xff] %vm203, %v215
  // Predicated region
  $region14: #{conv_block_forward.2} parent=0 // pred_check
    _
  $region15: #{conv_block_forward.2} parent=0 // pred_check_branch
    %218 = sbr.rel (0) target = $region17
  $region16: #{conv_block_forward.2} parent=0 // pred_region
    _
  $region17: #{conv_block_forward.2} parent=0 // pred_fallthru
    _
  // Predicated region
  $region18: #{conv_block_forward.2} parent=0 // pred_check
    _
  $region19: #{conv_block_forward.2} parent=0 // pred_check_branch
    %220 = sbr.rel (0) target = $region21
  $region20: #{conv_block_forward.2} parent=0 // pred_region
    _
  $region21: #{conv_block_forward.2} parent=0 // pred_fallthru
    _
  // Predicated region
  $region22: #{conv_block_forward.2} parent=0 // pred_check
    _
  $region23: #{conv_block_forward.2} parent=0 // pred_check_branch
    %222 = sbr.rel (0) target = $region25
  $region24: #{conv_block_forward.2} parent=0 // pred_region
    _
  $region25: #{conv_block_forward.2} parent=0 // pred_fallthru
    _
  // Predicated region
  $region26: #{conv_block_forward.2} parent=0 // pred_check
    _
  $region27: #{conv_block_forward.2} parent=0 // pred_check_branch
    %224 = sbr.rel (0) target = $region29
  $region28: #{conv_block_forward.2} parent=0 // pred_region
    _
  $region29: #{conv_block_forward.2} parent=0 // pred_fallthru
    _
  // Predicated region
  $region30: #{conv_block_forward.2} parent=0 // pred_check
    _
  $region31: #{conv_block_forward.2} parent=0 // pred_check_branch
    %226 = sbr.rel (0) target = $region33
  $region32: #{conv_block_forward.2} parent=0 // pred_region
    _
  $region33: #{conv_block_forward.2} parent=0 // pred_fallthru
    _
  // Predicated region
  $region34: #{conv_block_forward.2} parent=0 // pred_check
    _
  $region35: #{conv_block_forward.2} parent=0 // pred_check_branch
    %228 = sbr.rel (0) target = $region37
  $region36: #{conv_block_forward.2} parent=0 // pred_region
    _
  $region37: #{conv_block_forward.2} parent=0 // pred_fallthru
    _

</llo_original>
